<compile_context>
chip_gen: v7x
topology: tpu7x:2x2x1
jax: 0.10.0
libtpu: 0.0.40
codegen_flags: <defaults>
</compile_context>

<pallas_src>
import jax
import jax.numpy as jnp
from jax.experimental import pallas as pl
from jax.experimental.pallas import tpu as pltpu

HIDDEN1 = 64
HIDDEN2 = 32
LANE = 128          # lane-dense padded width for the fc3 output
TILE_B = 2048       # batch tile (rows) for the gridded path


def _mlp_kernel(x_ref, w1_ref, b1_ref, w2_ref, b2_ref, w3_ref, b3_ref, o_ref):
    # Fused 3-layer MLP on one batch tile; intermediates never leave VMEM.
    # Matmul inputs are bf16 (MXU-native), accumulation is f32.
    x = x_ref[...]  # bf16 (TB, in)
    h1 = jnp.dot(x, w1_ref[...], preferred_element_type=jnp.float32) + b1_ref[...]
    h1 = jnp.maximum(h1, 0.0).astype(jnp.bfloat16)
    h2 = jnp.dot(h1, w2_ref[...], preferred_element_type=jnp.float32) + b2_ref[...]
    h2 = jnp.maximum(h2, 0.0).astype(jnp.bfloat16)
    out = jnp.dot(h2, w3_ref[...], preferred_element_type=jnp.float32) + b3_ref[...]
    o_ref[...] = out.astype(o_ref.dtype)


def _cost_estimate(b_rows, in_size, weight_bytes):
    flops = 2 * b_rows * (in_size * HIDDEN1 + HIDDEN1 * HIDDEN2 + HIDDEN2 * LANE)
    bytes_accessed = b_rows * in_size * 2 + b_rows * LANE * 4 + weight_bytes
    return pl.CostEstimate(flops=flops, transcendentals=0,
                           bytes_accessed=bytes_accessed)


def decision_model_forward(x, params, tile_b=TILE_B):
    """x: (B, input_size) f32 (or bf16). Returns (B, output_size) f32."""
    w1, b1 = params["w1"], params["b1"]
    w2, b2 = params["w2"], params["b2"]
    w3p, b3p = params["w3_padded"], params["b3_padded"]
    out_size = params["out_size"]

    B, in_size = x.shape
    x_bf = x.astype(jnp.bfloat16)
    weight_bytes = (w1.size + w2.size + w3p.size) * 2 + (b1.size + b2.size + b3p.size) * 4
    weights = (w1, b1, w2, b2, w3p, b3p)

    if B <= tile_b:
        # Tiny batch: single VMEM-resident block, no grid (pure latency regime).
        vmem = pl.BlockSpec(memory_space=pltpu.MemorySpace.VMEM)
        out_p = pl.pallas_call(
            _mlp_kernel,
            out_shape=jax.ShapeDtypeStruct((B, LANE), jnp.float32),
            in_specs=[vmem] * 7,
            out_specs=vmem,
            cost_estimate=_cost_estimate(B, in_size, weight_bytes),
        )(x_bf, *weights)
        return out_p[:, :out_size]

    # Gridded path: tile the batch, keep weights resident across grid steps.
    num_tiles = pl.cdiv(B, tile_b)
    b_pad = num_tiles * tile_b
    if b_pad != B:
        x_bf = jnp.pad(x_bf, ((0, b_pad - B), (0, 0)))

    x_spec = pl.BlockSpec((tile_b, in_size), lambda i: (i, 0))
    out_spec = pl.BlockSpec((tile_b, LANE), lambda i: (i, 0))
    # Full-extent weight blocks; same block index every step => fetched once,
    # VMEM-resident across the whole grid.
    w_specs = [pl.BlockSpec(w.shape, lambda i: (0, 0)) for w in weights]

    out_p = pl.pallas_call(
        _mlp_kernel,
        out_shape=jax.ShapeDtypeStruct((b_pad, LANE), jnp.float32),
        grid=(num_tiles,),
        in_specs=[x_spec] + w_specs,
        out_specs=out_spec,
        compiler_params=pltpu.CompilerParams(
            dimension_semantics=("parallel",),  # megacore sharding on v7x
        ),
        cost_estimate=_cost_estimate(b_pad, in_size, weight_bytes),
    )(x_bf, *weights)
    return out_p[:B, :out_size]


def init_params(key, input_size, output_size):
    """PyTorch-style uniform(-1/sqrt(fan_in), 1/sqrt(fan_in)) init.
    Weights stored (in, out) in bf16; fc3 zero-padded to LANE output columns."""
    ks = jax.random.split(key, 6)

    def lin(kw, kb, fan_in, fan_out):
        bound = 1.0 / jnp.sqrt(jnp.float32(fan_in))
        w = jax.random.uniform(kw, (fan_in, fan_out), jnp.float32, -bound, bound)
        b = jax.random.uniform(kb, (1, fan_out), jnp.float32, -bound, bound)
        return w, b

    w1, b1 = lin(ks[0], ks[1], input_size, HIDDEN1)
    w2, b2 = lin(ks[2], ks[3], HIDDEN1, HIDDEN2)
    w3, b3 = lin(ks[4], ks[5], HIDDEN2, output_size)

    w3p = jnp.zeros((HIDDEN2, LANE), jnp.float32).at[:, :output_size].set(w3)
    b3p = jnp.zeros((1, LANE), jnp.float32).at[:, :output_size].set(b3)

    return {
        "w1": w1.astype(jnp.bfloat16), "b1": b1,
        "w2": w2.astype(jnp.bfloat16), "b2": b2,
        "w3_padded": w3p.astype(jnp.bfloat16), "b3_padded": b3p,
        "out_size": output_size,
    }


def _reference_forward(x, p):
    # Pure-JAX reference emulating the kernel's bf16-input / f32-accumulate math.
    f32, bf = jnp.float32, jnp.bfloat16
    xb = x.astype(bf).astype(f32)
    h1 = jnp.maximum(xb @ p["w1"].astype(f32) + p["b1"], 0.0)
    h1 = h1.astype(bf).astype(f32)
    h2 = jnp.maximum(h1 @ p["w2"].astype(f32) + p["b2"], 0.0)
    h2 = h2.astype(bf).astype(f32)
    out = h2 @ p["w3_padded"].astype(f32) + p["b3_padded"]
    return out[:, :p["out_size"]]


if __name__ == "__main__":
    key = jax.random.PRNGKey(0)
    k_params, k_x_small, k_x_big = jax.random.split(key, 3)

    input_size = 16
    output_size = 8
    params = init_params(k_params, input_size, output_size)

    # 1) Tiny batch (single-block, no-grid path) — matches the module's toy use.
    x_small = jax.random.normal(k_x_small, (2, input_size), jnp.float32)
    out_small = jax.block_until_ready(decision_model_forward(x_small, params))
    ref_small = _reference_forward(x_small, params)
    assert out_small.shape == (2, output_size)
    assert jnp.allclose(out_small, ref_small, atol=2e-2, rtol=2e-2), "small-batch mismatch"

    # 2) Larger, non-multiple batch to exercise the gridded/padded path.
    x_big = jax.random.normal(k_x_big, (2053, input_size), jnp.float32)
    out_big = jax.block_until_ready(decision_model_forward(x_big, params))
    ref_big = _reference_forward(x_big, params)
    assert out_big.shape == (2053, output_size)
    assert jnp.allclose(out_big, ref_big, atol=2e-2, rtol=2e-2), "big-batch mismatch"

    # TODO(synk): predict()/index_to_action() (argmax + role->string mapping) are
    # host-side logic, not part of the forward pass, so they stay outside the kernel.
    print("KERNEL_OK")
</pallas_src>

<mosaic_0001>
module attributes {stable_mosaic.version = 11 : i64} {
  func.func @_mlp_kernel(%arg0: memref<2x16xbf16, #tpu.memory_space<vmem>>, %arg1: memref<16x64xbf16, #tpu.memory_space<vmem>>, %arg2: memref<1x64xf32, #tpu.memory_space<vmem>>, %arg3: memref<64x32xbf16, #tpu.memory_space<vmem>>, %arg4: memref<1x32xf32, #tpu.memory_space<vmem>>, %arg5: memref<32x128xbf16, #tpu.memory_space<vmem>>, %arg6: memref<1x128xf32, #tpu.memory_space<vmem>>, %arg7: memref<2x128xf32, #tpu.memory_space<vmem>>) attributes {dimension_semantics = [], scalar_prefetch = 0 : i64, scratch_operands = 0 : i64, tpu.core_type = #tpu.core_type<tc>} {
    %c0 = arith.constant 0 : index
    %c0_0 = arith.constant 0 : index
    %0 = vector.load %arg0[%c0, %c0_0] : memref<2x16xbf16, #tpu.memory_space<vmem>>, vector<2x16xbf16>
    %c0_1 = arith.constant 0 : index
    %c0_2 = arith.constant 0 : index
    %1 = vector.load %arg1[%c0_1, %c0_2] : memref<16x64xbf16, #tpu.memory_space<vmem>>, vector<16x64xbf16>
    %cst = arith.constant dense<0.000000e+00> : vector<2x64xf32>
    %2 = tpu.matmul %0, %1, %cst {dimension_numbers = #tpu.dot_dimension_numbers<[1], [0], [0], [1], [0, 0, 1, 1], [], []>} : vector<2x16xbf16>, vector<16x64xbf16>, vector<2x64xf32> -> vector<2x64xf32>
    %c0_3 = arith.constant 0 : index
    %c0_4 = arith.constant 0 : index
    %3 = vector.load %arg2[%c0_3, %c0_4] : memref<1x64xf32, #tpu.memory_space<vmem>>, vector<1x64xf32>
    %4 = vector.broadcast %3 : vector<1x64xf32> to vector<2x64xf32>
    %5 = arith.addf %2, %4 : vector<2x64xf32>
    %cst_5 = arith.constant 0.000000e+00 : f32
    %6 = vector.broadcast %cst_5 : f32 to vector<2x64xf32>
    %7 = arith.maximumf %5, %6 : vector<2x64xf32>
    %8 = arith.truncf %7 : vector<2x64xf32> to vector<2x64xbf16>
    %c0_6 = arith.constant 0 : index
    %c0_7 = arith.constant 0 : index
    %9 = vector.load %arg3[%c0_6, %c0_7] : memref<64x32xbf16, #tpu.memory_space<vmem>>, vector<64x32xbf16>
    %cst_8 = arith.constant dense<0.000000e+00> : vector<2x32xf32>
    %10 = tpu.matmul %8, %9, %cst_8 {dimension_numbers = #tpu.dot_dimension_numbers<[1], [0], [0], [1], [0, 0, 1, 1], [], []>} : vector<2x64xbf16>, vector<64x32xbf16>, vector<2x32xf32> -> vector<2x32xf32>
    %c0_9 = arith.constant 0 : index
    %c0_10 = arith.constant 0 : index
    %11 = vector.load %arg4[%c0_9, %c0_10] : memref<1x32xf32, #tpu.memory_space<vmem>>, vector<1x32xf32>
    %12 = vector.broadcast %11 : vector<1x32xf32> to vector<2x32xf32>
    %13 = arith.addf %10, %12 : vector<2x32xf32>
    %cst_11 = arith.constant 0.000000e+00 : f32
    %14 = vector.broadcast %cst_11 : f32 to vector<2x32xf32>
    %15 = arith.maximumf %13, %14 : vector<2x32xf32>
    %16 = arith.truncf %15 : vector<2x32xf32> to vector<2x32xbf16>
    %c0_12 = arith.constant 0 : index
    %c0_13 = arith.constant 0 : index
    %17 = vector.load %arg5[%c0_12, %c0_13] : memref<32x128xbf16, #tpu.memory_space<vmem>>, vector<32x128xbf16>
    %cst_14 = arith.constant dense<0.000000e+00> : vector<2x128xf32>
    %18 = tpu.matmul %16, %17, %cst_14 {dimension_numbers = #tpu.dot_dimension_numbers<[1], [0], [0], [1], [0, 0, 1, 1], [], []>} : vector<2x32xbf16>, vector<32x128xbf16>, vector<2x128xf32> -> vector<2x128xf32>
    %c0_15 = arith.constant 0 : index
    %c0_16 = arith.constant 0 : index
    %19 = vector.load %arg6[%c0_15, %c0_16] : memref<1x128xf32, #tpu.memory_space<vmem>>, vector<1x128xf32>
    %20 = vector.broadcast %19 : vector<1x128xf32> to vector<2x128xf32>
    %21 = arith.addf %18, %20 : vector<2x128xf32>
    %c0_17 = arith.constant 0 : index
    %c0_18 = arith.constant 0 : index
    %22 = vector.load %arg7[%c0_17, %c0_18] : memref<2x128xf32, #tpu.memory_space<vmem>>, vector<2x128xf32>
    tpu.vector_store %arg7[%c0_17, %c0_18], %21 {strides = array<i32>} : memref<2x128xf32, #tpu.memory_space<vmem>>, vector<2x128xf32>,
    return
  }
}

</mosaic_0001>

<llo_original>
// kernel: tpu_custom_call.1
$region0: #{tpu_custom_call.1}
  #allocation0 [shape = 'u32[]', space=smem, size = 0x4, offset = 0x4, fixed_abs, tag = 'smem constant byte address 0x4 - core index']
  #allocation1 [shape = 'u32[144,128]{1,0:T(1,128)}', space=vmem, size = 0x12000, scoped, tag = 'internal scratch']
  %s0 = inlined_call_operand.vmem [shape: bf16[2,16], index: 0, kind: input, shape index: {}]
  %s1 = inlined_call_operand.vmem [shape: bf16[16,64], index: 1, kind: input, shape index: {}]
  %s2 = inlined_call_operand.vmem [shape: f32[1,64], index: 2, kind: input, shape index: {}]
  %s3 = inlined_call_operand.vmem [shape: bf16[64,32], index: 3, kind: input, shape index: {}]
  %s4 = inlined_call_operand.vmem [shape: f32[1,32], index: 4, kind: input, shape index: {}]
  %s5 = inlined_call_operand.vmem [shape: bf16[32,128], index: 5, kind: input, shape index: {}]
  %s6 = inlined_call_operand.vmem [shape: f32[1,128], index: 6, kind: input, shape index: {}]
  %s7 = inlined_call_operand.hbm [shape: f32[2,128], index: 7, kind: output, shape index: {}]
  %s8 = sld [smem:[#allocation0]]
  $region38: #{tpu_custom_call.1} parent=0
    _
  %s10 = ssub.s32 1, %s8
  %s11 = scalar_select 0, %s10, %s8
  $region1: #{tpu_custom_call.1} parent=0
    #allocation2 [shape = 'u8[1024]{0}', space=vmem, size = 0x400, scoped, tag = 'output window, operand 0, single buffered']
    #allocation3 [shape = 's32[1]{0}', space=sflag, size = 0x4, scoped, tag = 'scoped memory for tpu_custom_call.1']
    %12 = vsyncpa [#allocation3], 0
    // Predicated region
    $region2: #{tpu_custom_call.1} parent=1 // pred_check
      _
    $region3: #{tpu_custom_call.1} parent=1 // pred_check_branch
      %14 = sbr.rel (0) target = $region5
    $region4: #{tpu_custom_call.1} parent=1 // pred_region
      _
    $region5: #{tpu_custom_call.1} parent=1 // pred_fallthru
      _
    // Predicated region
    $region6: #{tpu_custom_call.1} parent=1 // pred_check
      _
    $region7: #{tpu_custom_call.1} parent=1 // pred_check_branch
      %16 = sbr.rel (0) target = $region9
    $region8: #{tpu_custom_call.1} parent=1 // pred_region
      _
    $region9: #{tpu_custom_call.1} parent=1 // pred_fallthru
      _
    // Predicated region
    $region10: #{tpu_custom_call.1} parent=1 // pred_check
      _
    $region11: #{tpu_custom_call.1} parent=1 // pred_check_branch
      %18 = sbr.rel (0) target = $region13
    $region12: #{tpu_custom_call.1} parent=1 // pred_region
      _
    $region13: #{tpu_custom_call.1} parent=1 // pred_fallthru
      _
    // Predicated region
    $region14: #{tpu_custom_call.1} parent=1 // pred_check
      _
    $region15: #{tpu_custom_call.1} parent=1 // pred_check_branch
      %20 = sbr.rel (0) target = $region17
    $region16: #{tpu_custom_call.1} parent=1 // pred_region
      _
    $region17: #{tpu_custom_call.1} parent=1 // pred_fallthru
      _
    // Predicated region
    $region18: #{tpu_custom_call.1} parent=1 // pred_check
      _
    $region19: #{tpu_custom_call.1} parent=1 // pred_check_branch
      %22 = sbr.rel (0) target = $region21
    $region20: #{tpu_custom_call.1} parent=1 // pred_region
      _
    $region21: #{tpu_custom_call.1} parent=1 // pred_fallthru
      _
    // Predicated region
    $region22: #{tpu_custom_call.1} parent=1 // pred_check
      _
    $region23: #{tpu_custom_call.1} parent=1 // pred_check_branch
      %24 = sbr.rel (0) target = $region25
    $region24: #{tpu_custom_call.1} parent=1 // pred_region
      _
    $region25: #{tpu_custom_call.1} parent=1 // pred_fallthru
      _
    // Predicated region
    $region26: #{tpu_custom_call.1} parent=1 // pred_check
      _
    $region27: #{tpu_custom_call.1} parent=1 // pred_check_branch
      %26 = sbr.rel (0) target = $region29
    $region28: #{tpu_custom_call.1} parent=1 // pred_region
      _
    $region29: #{tpu_custom_call.1} parent=1 // pred_fallthru
      _
    %v28 = vld [vmem:[%s0] sm:$0x1]
    %v29 = vld [vmem:[%s1] sm:$0xf]
    %v30 = vld [vmem:[%s1 + $0x4] sm:$0xf]
    %v31 = vld [vmem:[%s2] sm:$0x1]
    %v33 = vlaneseq
    %v34 = vshrl.u32 %v33, 7
    %v35 = vsub.s32 0, %v34
    %v36 = vrot.slane %v31, %v35
    %v40 = vunpack.c.l.b16 %v29
    %v41 = vunpack.c.l.b16 %v30
    %v42 = vpack.c.b16 %v41, %v40
    %vm44 = vcmask 130048
    %v46 = vsel %vm44, %v28, 0
    %48 = vmatprep.subr.bf16.mxu0 0
    %49 = vmatpush1.bf16.msra.mxu0 %v42
    %50 = vmatprep.subr.bf16.mxu0 0
    %51 = vmatpush1.bf16.msra.mxu0 0
    %52 = vmatprep.subr.bf16.mxu0 0
    %53 = vmatpush1.bf16.msra.mxu0 0
    %54 = vmatprep.subr.bf16.mxu0 0
    %55 = vmatpush1.bf16.msra.mxu0 0
    %56 = vmatprep.subr.bf16.mxu0 0
    %57 = vmatpush1.bf16.msra.mxu0 0
    %58 = vmatprep.subr.bf16.mxu0 0
    %59 = vmatpush1.bf16.msra.mxu0 0
    %60 = vmatprep.subr.bf16.mxu0 0
    %61 = vmatpush1.bf16.msra.mxu0 0
    %62 = vmatprep.subr.bf16.mxu0 0
    %63 = vmatpush1.bf16.msra.mxu0 0
    %64 = vmatprep.subr.bf16.mxu0 0
    %65 = vmatpush1.bf16.msra.mxu0 0
    %66 = vmatprep.subr.bf16.mxu0 0
    %67 = vmatpush1.bf16.msra.mxu0 0
    %68 = vmatprep.subr.bf16.mxu0 0
    %69 = vmatpush1.bf16.msra.mxu0 0
    %70 = vmatprep.subr.bf16.mxu0 0
    %71 = vmatpush1.bf16.msra.mxu0 0
    %72 = vmatprep.subr.bf16.mxu0 0
    %73 = vmatpush1.bf16.msra.mxu0 0
    %74 = vmatprep.subr.bf16.mxu0 0
    %75 = vmatpush1.bf16.msra.mxu0 0
    %76 = vmatprep.subr.bf16.mxu0 0
    %77 = vmatpush1.bf16.msra.mxu0 0
    %78 = vmatprep.subr.bf16.mxu0 0
    %79 = vmatpush1.bf16.msra.mxu0 0
    %80 = vmatprep.mubr.bf16.mxu0 0
    %81 = vmatmul.mubr.bf16.gmra.mrb[0].mxu0 %v46
    %v82 = vpop.f32.mrb[0].mxu0
    %v83 = vadd.f32 %v36, %v82
    %v84 = vpop.f32.mrb[0].mxu0
    %v85 = vpop.f32.mrb[0].mxu0
    %v86 = vpop.f32.mrb[0].mxu0
    %87 = vdwg.mxu0
    %v88 = vmax.f32 %v83, 0.0
    %v89 = vpack.c.bf16 %v88, %v88
    %v90 = vld [vmem:[%s3] sm:$0xf]
    %v91 = vld [vmem:[%s3 + $0x4] sm:$0xf]
    %v92 = vld [vmem:[%s3 + $0x8] sm:$0xf]
    %v93 = vld [vmem:[%s3 + $0xc] sm:$0xf]
    %v94 = vld [vmem:[%s3 + $0x10] sm:$0xf]
    %v95 = vld [vmem:[%s3 + $0x14] sm:$0xf]
    %v96 = vld [vmem:[%s3 + $0x18] sm:$0xf]
    %v97 = vld [vmem:[%s3 + $0x1c] sm:$0xf]
    %v98 = vld [vmem:[%s4] sm:$0x1]
    %v100 = vlaneseq
    %v101 = vshrl.u32 %v100, 7
    %v102 = vsub.s32 0, %v101
    %v103 = vrot.slane %v98, %v102
    %v113 = vunpack.c.l.b16 %v90
    %v114 = vunpack.c.l.b16 %v91
    %v115 = vunpack.c.l.b16 %v92
    %v116 = vunpack.c.l.b16 %v93
    %v117 = vunpack.c.l.b16 %v94
    %v118 = vunpack.c.l.b16 %v95
    %v119 = vunpack.c.l.b16 %v96
    %v120 = vunpack.c.l.b16 %v97
    %v121 = vpack.c.b16 %v114, %v113
    %v122 = vpack.c.b16 %v116, %v115
    %v123 = vpack.c.b16 %v118, %v117
    %v124 = vpack.c.b16 %v120, %v119
    %vm129 = vcmask 523264
    %v131 = vsel %vm129, %v89, 0
    %133 = vmatprep.subr.bf16.mxu0 0
    %134 = vmatpush1.bf16.msra.mxu0 %v121
    %135 = vmatprep.subr.bf16.mxu0 0
    %136 = vmatpush1.bf16.msra.mxu0 %v122
    %137 = vmatprep.subr.bf16.mxu0 0
    %138 = vmatpush1.bf16.msra.mxu0 %v123
    %139 = vmatprep.subr.bf16.mxu0 0
    %140 = vmatpush1.bf16.msra.mxu0 %v124
    %141 = vmatprep.subr.bf16.mxu0 0
    %142 = vmatpush1.bf16.msra.mxu0 0
    %143 = vmatprep.subr.bf16.mxu0 0
    %144 = vmatpush1.bf16.msra.mxu0 0
    %145 = vmatprep.subr.bf16.mxu0 0
    %146 = vmatpush1.bf16.msra.mxu0 0
    %147 = vmatprep.subr.bf16.mxu0 0
    %148 = vmatpush1.bf16.msra.mxu0 0
    %149 = vmatprep.subr.bf16.mxu0 0
    %150 = vmatpush1.bf16.msra.mxu0 0
    %151 = vmatprep.subr.bf16.mxu0 0
    %152 = vmatpush1.bf16.msra.mxu0 0
    %153 = vmatprep.subr.bf16.mxu0 0
    %154 = vmatpush1.bf16.msra.mxu0 0
    %155 = vmatprep.subr.bf16.mxu0 0
    %156 = vmatpush1.bf16.msra.mxu0 0
    %157 = vmatprep.subr.bf16.mxu0 0
    %158 = vmatpush1.bf16.msra.mxu0 0
    %159 = vmatprep.subr.bf16.mxu0 0
    %160 = vmatpush1.bf16.msra.mxu0 0
    %161 = vmatprep.subr.bf16.mxu0 0
    %162 = vmatpush1.bf16.msra.mxu0 0
    %163 = vmatprep.subr.bf16.mxu0 0
    %164 = vmatpush1.bf16.msra.mxu0 0
    %165 = vmatprep.mubr.bf16.mxu0 0
    %166 = vmatmul.mubr.bf16.gmra.mrb[0].mxu0 %v131
    %v167 = vpop.f32.mrb[0].mxu0
    %v168 = vadd.f32 %v103, %v167
    %v169 = vpop.f32.mrb[0].mxu0
    %v170 = vpop.f32.mrb[0].mxu0
    %v171 = vpop.f32.mrb[0].mxu0
    %172 = vdwg.mxu0
    %v173 = vmax.f32 %v168, 0.0
    %v174 = vpack.c.bf16 %v173, %v173
    %v175 = vld [vmem:[%s5] sm:$0xf]
    %v176 = vld [vmem:[%s5 + $0x4] sm:$0xf]
    %v177 = vld [vmem:[%s5 + $0x8] sm:$0xf]
    %v178 = vld [vmem:[%s5 + $0xc] sm:$0xf]
    %v179 = vld [vmem:[%s6] sm:$0x1]
    %v181 = vlaneseq
    %v182 = vshrl.u32 %v181, 7
    %v183 = vsub.s32 0, %v182
    %v184 = vrot.slane %v179, %v183
    %v190 = vunpack.c.l.b16 %v175
    %v191 = vunpack.c.l.b16 %v176
    %v192 = vunpack.c.l.b16 %v177
    %v193 = vunpack.c.l.b16 %v178
    %v194 = vpack.c.b16 %v191, %v190
    %v195 = vpack.c.b16 %v193, %v192
    %vm198 = vcmask 261120
    %v200 = vsel %vm198, %v174, 0
    %202 = vmatprep.subr.bf16.mxu0 0
    %203 = vmatpush1.bf16.msra.mxu0 %v194
    %204 = vmatprep.subr.bf16.mxu0 0
    %205 = vmatpush1.bf16.msra.mxu0 %v195
    %206 = vmatprep.subr.bf16.mxu0 0
    %207 = vmatpush1.bf16.msra.mxu0 0
    %208 = vmatprep.subr.bf16.mxu0 0
    %209 = vmatpush1.bf16.msra.mxu0 0
    %210 = vmatprep.subr.bf16.mxu0 0
    %211 = vmatpush1.bf16.msra.mxu0 0
    %212 = vmatprep.subr.bf16.mxu0 0
    %213 = vmatpush1.bf16.msra.mxu0 0
    %214 = vmatprep.subr.bf16.mxu0 0
    %215 = vmatpush1.bf16.msra.mxu0 0
    %216 = vmatprep.subr.bf16.mxu0 0
    %217 = vmatpush1.bf16.msra.mxu0 0
    %218 = vmatprep.subr.bf16.mxu0 0
    %219 = vmatpush1.bf16.msra.mxu0 0
    %220 = vmatprep.subr.bf16.mxu0 0
    %221 = vmatpush1.bf16.msra.mxu0 0
    %222 = vmatprep.subr.bf16.mxu0 0
    %223 = vmatpush1.bf16.msra.mxu0 0
    %224 = vmatprep.subr.bf16.mxu0 0
    %225 = vmatpush1.bf16.msra.mxu0 0
    %226 = vmatprep.subr.bf16.mxu0 0
    %227 = vmatpush1.bf16.msra.mxu0 0
    %228 = vmatprep.subr.bf16.mxu0 0
    %229 = vmatpush1.bf16.msra.mxu0 0
    %230 = vmatprep.subr.bf16.mxu0 0
    %231 = vmatpush1.bf16.msra.mxu0 0
    %232 = vmatprep.subr.bf16.mxu0 0
    %233 = vmatpush1.bf16.msra.mxu0 0
    %234 = vmatprep.mubr.bf16.mxu0 0
    %235 = vmatmul.mubr.bf16.gmra.mrb[0].mxu0 %v200
    %v236 = vpop.f32.mrb[0].mxu0
    %v237 = vadd.f32 %v184, %v236
    %v238 = vpop.f32.mrb[0].mxu0
    %v239 = vpop.f32.mrb[0].mxu0
    %v240 = vpop.f32.mrb[0].mxu0
    %241 = vdwg.mxu0
    %242 = vst [vmem:[#allocation2] sm:$0x3] %v237
    // Predicated region
    $region30: #{tpu_custom_call.1} parent=1 // pred_check
      _
    $region31: #{tpu_custom_call.1} parent=1 // pred_check_branch
      %244 = sbr.rel (0) target = $region33
    $region32: #{tpu_custom_call.1} parent=1 // pred_region
      %s246 = ssub.s32 32, 32
      %247 = vsyncadd [#allocation3], %s246
      %s249 = sshll.u32 [#allocation2], 4
      %s250 = int_to_ptr.vmem [resolvable:$true] %s249
      %252 = dma.vmem_to_hbm [thread:$0]  %s250, 32, %s7, [#allocation3]
    $region33: #{tpu_custom_call.1} parent=1 // pred_fallthru
      _
    // Predicated region
    $region34: #{tpu_custom_call.1} parent=1 // pred_check
      _
    $region35: #{tpu_custom_call.1} parent=1 // pred_check_branch
      %254 = sbr.rel (0) target = $region37
    $region36: #{tpu_custom_call.1} parent=1 // pred_region
      %255 = dma.done [#allocation3], 32
    $region37: #{tpu_custom_call.1} parent=1 // pred_fallthru
      _
    %256 = vsyncpa [#allocation3], 1

</llo_original>
